<compile_context>
chip_gen: v7x
topology: tpu7x:2x2x1
jax: 0.10.0
libtpu: 0.0.40
codegen_flags: <defaults>
</compile_context>

<pallas_src>
import functools

import jax
import jax.numpy as jnp
from jax.experimental import pallas as pl
from jax.experimental.pallas import tpu as pltpu


# ----------------------- "CNNConfig" (synthetic, small) -----------------------
class CNNConfig:
    EMBEDDING_DIM = 32
    KERNEL_SIZES = (3, 4, 5)
    NUM_FILTERS = 16
    NUM_CLASSES = 4


NFP = 128   # filter dim (len(ks) * F = 48) zero-padded to a full lane group


# ------------------------------- Pallas kernel --------------------------------
def fused_cnn_kernel(e_dim, emb_ref, wc_ref, bc_ref, mask_ref, wf_ref, bf_ref,
                     o_ref):
    # emb_ref : (TB, S_pad*E)  bf16  flattened, time-padded embeddings (batch tile)
    # wc_ref  : (KMAX*E, NFP)  bf16  im2col conv weights (branch-concat, zero-padded)
    # bc_ref  : (1, NFP)       f32   conv bias (zero-padded)
    # mask_ref: (S, NFP)       f32   1.0 where the time position is valid per branch
    # wf_ref  : (NFP, C)       bf16  fc weight (transposed, zero rows for padding)
    # bf_ref  : (1, C)         f32   fc bias
    # o_ref   : (TB, C)        f32   log_softmax(fc(pooled))
    TB = emb_ref.shape[0]
    KE, nfp = wc_ref.shape
    S = mask_ref.shape[0]

    emb = emb_ref[...]                                       # (TB, S_pad*E) bf16

    # In-kernel im2col: the window at time t is the contiguous lane slice
    # emb[:, t*E : t*E + KMAX*E].  Concatenate time-major along the M axis so no
    # (batch, time) interleave/relayout is needed before the matmul.
    xcat = jnp.concatenate(
        [emb[:, t * e_dim: t * e_dim + KE] for t in range(S)],
        axis=0)                                              # (S*TB, KMAX*E) bf16

    # All three conv branches in ONE matmul: M = S*TB, K = KMAX*E, N = NFP.
    acc = jnp.dot(xcat, wc_ref[...],
                  preferred_element_type=jnp.float32)        # (S*TB, NFP) f32

    s = acc.reshape(S, TB, nfp) + bc_ref[...].reshape(1, 1, nfp)
    s = jnp.maximum(s, 0.0)                                  # ReLU (f32, VPU)
    # Zero invalid time positions AFTER ReLU (safe: ReLU >= 0 and each branch has
    # at least one valid position since S >= k for every kernel size).
    s = s * mask_ref[...].reshape(S, 1, nfp)
    pooled = jnp.max(s, axis=0)                              # time max-pool (TB, NFP)

    logits = jnp.dot(pooled.astype(wf_ref.dtype), wf_ref[...],
                     preferred_element_type=jnp.float32) + bf_ref[...]
    m = jnp.max(logits, axis=1, keepdims=True)
    z = logits - m
    lse = jnp.log(jnp.sum(jnp.exp(z), axis=1, keepdims=True))
    o_ref[...] = z - lse                                     # only (B, C) hits HBM


# --------------------------------- glue / model --------------------------------
def _round_up(x, m):
    return ((x + m - 1) // m) * m


def _pick_batch_tile(batch):
    # Multiple of 8 (sublanes); large enough to amortize the ~0.35us/step grid
    # overhead; >= 2 grid steps once B > 128 so v7x's second TensorCore gets work.
    if batch <= 128:
        return _round_up(batch, 8)
    if batch <= 1024:
        return _round_up(pl.cdiv(batch, 2), 8)
    return 512


def init_params(key, vocab_size):
    E = CNNConfig.EMBEDDING_DIM
    F = CNNConfig.NUM_FILTERS
    C = CNNConfig.NUM_CLASSES
    ks = CNNConfig.KERNEL_SIZES
    kmax = max(ks)
    NF = len(ks) * F

    keys = jax.random.split(key, 3 + 2 * len(ks))
    params = {}

    # Embedding table with one extra all-zero row used as the time-pad token, so
    # the gather emits the padded stream directly (no separate jnp.pad of emb).
    emb = jax.random.normal(keys[0], (vocab_size, E), jnp.float32)
    params["embedding"] = jnp.concatenate(
        [emb, jnp.zeros((1, E), jnp.float32)], axis=0).astype(jnp.bfloat16)

    # Fused im2col conv weights: wc2d[j*E + e, i*F + f] = W_k[f, 0, j, e] for
    # j < k; zeros for shifts j >= k and for padded filter columns NF..NFP-1.
    wconv = jnp.zeros((kmax, E, NFP), jnp.float32)
    bconv = jnp.zeros((1, NFP), jnp.float32)
    convs_ref = []
    for i, k in enumerate(ks):
        # PyTorch Conv2d weight shape: (F, 1, k, E)
        w = 0.1 * jax.random.normal(keys[1 + 2 * i], (F, 1, k, E), jnp.float32)
        b = 0.1 * jax.random.normal(keys[2 + 2 * i], (F,), jnp.float32)
        wconv = wconv.at[:k, :, i * F:(i + 1) * F].set(
            jnp.transpose(w[:, 0, :, :], (1, 2, 0)))         # (k, E, F)
        bconv = bconv.at[0, i * F:(i + 1) * F].set(b)
        # im2col layout for the pure-JAX reference (same bf16 values)
        convs_ref.append((w.reshape(F, k * E).T.astype(jnp.bfloat16),
                          b.reshape(1, F)))
    params["conv_w2d"] = wconv.reshape(kmax * E, NFP).astype(jnp.bfloat16)
    params["conv_b"] = bconv                                  # (1, NFP)
    params["convs_ref"] = convs_ref

    fc_w = 0.1 * jax.random.normal(keys[-2], (C, NF), jnp.float32)
    fc_b = 0.1 * jax.random.normal(keys[-1], (C,), jnp.float32)
    fc_wp = jnp.zeros((NFP, C), jnp.float32).at[:NF].set(fc_w.T)
    params["fc_w"] = fc_wp.astype(jnp.bfloat16)               # (NFP, C)
    params["fc_b"] = fc_b.reshape(1, C)                       # (1, C)
    return params


def cnn_forward(params, tokens):
    E = CNNConfig.EMBEDDING_DIM
    F = CNNConfig.NUM_FILTERS
    C = CNNConfig.NUM_CLASSES
    ks = CNNConfig.KERNEL_SIZES
    kmax = max(ks)
    NF = len(ks) * F

    B, S = tokens.shape
    S_pad = S + kmax - 1
    pad_id = params["embedding"].shape[0] - 1                 # the all-zero row

    TB = _pick_batch_tile(B)
    Bp = pl.cdiv(B, TB) * TB

    # Fold batch + time padding into the gather; flatten to a lane-dense
    # (Bp, S_pad*E) block so the kernel's DMAs and vector loads are unmasked.
    tokens_p = jnp.pad(tokens, ((0, Bp - B), (0, kmax - 1)),
                       constant_values=pad_id)
    # TODO(synk): the embedding gather stays in XLA; a PrefetchScalarGridSpec row
    # gather only pays off once B*S*E reaches tens of MB.
    emb = jnp.take(params["embedding"], tokens_p, axis=0)     # (Bp, S_pad, E) bf16
    emb_flat = emb.reshape(Bp, S_pad * E)

    # Per-column time-validity mask (branch k valid for t <= S - k); padded
    # filter columns masked to 0 (their fc rows are zero anyway).
    t = jnp.arange(S, dtype=jnp.int32)[:, None]               # (S, 1)
    limits = jnp.concatenate(
        [jnp.full((F,), S - k, jnp.int32) for k in ks]
        + [jnp.full((NFP - NF,), -1, jnp.int32)])             # (NFP,)
    mask = (t <= limits[None, :]).astype(jnp.float32)          # (S, NFP)

    kernel = functools.partial(fused_cnn_kernel, E)

    out = pl.pallas_call(
        kernel,
        out_shape=jax.ShapeDtypeStruct((Bp, C), jnp.float32),
        grid=(Bp // TB,),
        in_specs=[
            pl.BlockSpec((TB, S_pad * E), lambda b: (b, 0)),
            pl.BlockSpec((kmax * E, NFP), lambda b: (0, 0)),
            pl.BlockSpec((1, NFP), lambda b: (0, 0)),
            pl.BlockSpec((S, NFP), lambda b: (0, 0)),
            pl.BlockSpec((NFP, C), lambda b: (0, 0)),
            pl.BlockSpec((1, C), lambda b: (0, 0)),
        ],
        out_specs=pl.BlockSpec((TB, C), lambda b: (b, 0)),
        compiler_params=pltpu.CompilerParams(
            dimension_semantics=("parallel",),
            vmem_limit_bytes=32 * 1024 * 1024),
    )(emb_flat, params["conv_w2d"], params["conv_b"], mask,
      params["fc_w"], params["fc_b"])
    return out[:B]


# ------------------------------ pure-JAX reference ------------------------------
def im2col(emb, k):
    B, S, E = emb.shape
    L = S - k + 1
    cols = jnp.stack([emb[:, i:i + L, :] for i in range(k)], axis=2)  # (B,L,k,E)
    return cols.reshape(B, L, k * E)


def cnn_forward_ref(params, tokens):
    F = CNNConfig.NUM_FILTERS
    ks = CNNConfig.KERNEL_SIZES
    NF = len(ks) * F
    emb = jnp.take(params["embedding"], tokens, axis=0)       # (B, S, E) bf16
    pooled = []
    for (w_mat, bias), k in zip(params["convs_ref"], ks):
        x_col = im2col(emb, k)                                # (B, L, k*E)
        s = jnp.einsum("blk,kf->blf", x_col, w_mat,
                       preferred_element_type=jnp.float32) + bias[None, :, :]
        pooled.append(jnp.max(jnp.maximum(s, 0.0), axis=1))
    feat = jnp.concatenate(pooled, axis=1)                    # (B, NF) f32
    logits = jnp.dot(feat.astype(jnp.bfloat16), params["fc_w"][:NF],
                     preferred_element_type=jnp.float32) + params["fc_b"]
    return jax.nn.log_softmax(logits, axis=1)


if __name__ == "__main__":
    B, S, VOCAB = 2, 16, 50
    key = jax.random.PRNGKey(0)
    k_tok, k_par = jax.random.split(key)
    tokens = jax.random.randint(k_tok, (B, S), 0, VOCAB, dtype=jnp.int32)
    params = init_params(k_par, VOCAB)

    out = jax.jit(cnn_forward)(params, tokens)
    out = jax.block_until_ready(out)

    ref = cnn_forward_ref(params, tokens)
    assert out.shape == (B, CNNConfig.NUM_CLASSES)
    assert jnp.allclose(out, ref, atol=5e-3, rtol=5e-3), "mismatch vs reference"
    print("KERNEL_OK")
</pallas_src>

<mosaic_0001>
module attributes {stable_mosaic.version = 11 : i64} {
  func.func @fused_cnn_kernel(%arg0: i32, %arg1: memref<8x640xbf16, #tpu.memory_space<vmem>>, %arg2: memref<160x128xbf16, #tpu.memory_space<vmem>>, %arg3: memref<1x128xf32, #tpu.memory_space<vmem>>, %arg4: memref<16x128xf32, #tpu.memory_space<vmem>>, %arg5: memref<128x4xbf16, #tpu.memory_space<vmem>>, %arg6: memref<1x4xf32, #tpu.memory_space<vmem>>, %arg7: memref<8x4xf32, #tpu.memory_space<vmem>>) attributes {dimension_semantics = [#tpu.dimension_semantics<parallel>], iteration_bounds = array<i64: 1>, scalar_prefetch = 0 : i64, scratch_operands = 0 : i64, tpu.core_type = #tpu.core_type<tc>, window_params = [{transform_indices = @transform_0, window_bounds = array<i64: 8, 640>}, {pipeline_mode = #tpu.pipeline_mode<synchronous>, transform_indices = @transform_1, window_bounds = array<i64: 160, 128>}, {pipeline_mode = #tpu.pipeline_mode<synchronous>, transform_indices = @transform_2, window_bounds = array<i64: 1, 128>}, {pipeline_mode = #tpu.pipeline_mode<synchronous>, transform_indices = @transform_3, window_bounds = array<i64: 16, 128>}, {pipeline_mode = #tpu.pipeline_mode<synchronous>, transform_indices = @transform_4, window_bounds = array<i64: 128, 4>}, {pipeline_mode = #tpu.pipeline_mode<synchronous>, transform_indices = @transform_5, window_bounds = array<i64: 1, 4>}, {transform_indices = @transform_6, window_bounds = array<i64: 8, 4>}]} {
    %c0 = arith.constant 0 : index
    %c0_0 = arith.constant 0 : index
    %0 = vector.load %arg1[%c0, %c0_0] : memref<8x640xbf16, #tpu.memory_space<vmem>>, vector<8x640xbf16>
    %1 = vector.extract_strided_slice %0 {offsets = [0, 0], sizes = [8, 160], strides = [1, 1]} : vector<8x640xbf16> to vector<8x160xbf16>
    %2 = vector.extract_strided_slice %0 {offsets = [0, 32], sizes = [8, 160], strides = [1, 1]} : vector<8x640xbf16> to vector<8x160xbf16>
    %3 = vector.extract_strided_slice %0 {offsets = [0, 64], sizes = [8, 160], strides = [1, 1]} : vector<8x640xbf16> to vector<8x160xbf16>
    %4 = vector.extract_strided_slice %0 {offsets = [0, 96], sizes = [8, 160], strides = [1, 1]} : vector<8x640xbf16> to vector<8x160xbf16>
    %5 = vector.extract_strided_slice %0 {offsets = [0, 128], sizes = [8, 160], strides = [1, 1]} : vector<8x640xbf16> to vector<8x160xbf16>
    %6 = vector.extract_strided_slice %0 {offsets = [0, 160], sizes = [8, 160], strides = [1, 1]} : vector<8x640xbf16> to vector<8x160xbf16>
    %7 = vector.extract_strided_slice %0 {offsets = [0, 192], sizes = [8, 160], strides = [1, 1]} : vector<8x640xbf16> to vector<8x160xbf16>
    %8 = vector.extract_strided_slice %0 {offsets = [0, 224], sizes = [8, 160], strides = [1, 1]} : vector<8x640xbf16> to vector<8x160xbf16>
    %9 = vector.extract_strided_slice %0 {offsets = [0, 256], sizes = [8, 160], strides = [1, 1]} : vector<8x640xbf16> to vector<8x160xbf16>
    %10 = vector.extract_strided_slice %0 {offsets = [0, 288], sizes = [8, 160], strides = [1, 1]} : vector<8x640xbf16> to vector<8x160xbf16>
    %11 = vector.extract_strided_slice %0 {offsets = [0, 320], sizes = [8, 160], strides = [1, 1]} : vector<8x640xbf16> to vector<8x160xbf16>
    %12 = vector.extract_strided_slice %0 {offsets = [0, 352], sizes = [8, 160], strides = [1, 1]} : vector<8x640xbf16> to vector<8x160xbf16>
    %13 = vector.extract_strided_slice %0 {offsets = [0, 384], sizes = [8, 160], strides = [1, 1]} : vector<8x640xbf16> to vector<8x160xbf16>
    %14 = vector.extract_strided_slice %0 {offsets = [0, 416], sizes = [8, 160], strides = [1, 1]} : vector<8x640xbf16> to vector<8x160xbf16>
    %15 = vector.extract_strided_slice %0 {offsets = [0, 448], sizes = [8, 160], strides = [1, 1]} : vector<8x640xbf16> to vector<8x160xbf16>
    %16 = vector.extract_strided_slice %0 {offsets = [0, 480], sizes = [8, 160], strides = [1, 1]} : vector<8x640xbf16> to vector<8x160xbf16>
    %17 = tpu.concatenate %1, %2, %3, %4, %5, %6, %7, %8, %9, %10, %11, %12, %13, %14, %15, %16 in 0 : vector<8x160xbf16>, vector<8x160xbf16>, vector<8x160xbf16>, vector<8x160xbf16>, vector<8x160xbf16>, vector<8x160xbf16>, vector<8x160xbf16>, vector<8x160xbf16>, vector<8x160xbf16>, vector<8x160xbf16>, vector<8x160xbf16>, vector<8x160xbf16>, vector<8x160xbf16>, vector<8x160xbf16>, vector<8x160xbf16>, vector<8x160xbf16> -> vector<128x160xbf16>
    %c0_1 = arith.constant 0 : index
    %c0_2 = arith.constant 0 : index
    %18 = vector.load %arg2[%c0_1, %c0_2] : memref<160x128xbf16, #tpu.memory_space<vmem>>, vector<160x128xbf16>
    %cst = arith.constant dense<0.000000e+00> : vector<128x128xf32>
    %19 = tpu.matmul %17, %18, %cst {dimension_numbers = #tpu.dot_dimension_numbers<[1], [0], [0], [1], [0, 0, 1, 1], [], []>} : vector<128x160xbf16>, vector<160x128xbf16>, vector<128x128xf32> -> vector<128x128xf32>
    %20 = vector.shape_cast %19 : vector<128x128xf32> to vector<16x8x128xf32>
    %c0_3 = arith.constant 0 : index
    %c0_4 = arith.constant 0 : index
    %21 = vector.load %arg3[%c0_3, %c0_4] : memref<1x128xf32, #tpu.memory_space<vmem>>, vector<1x128xf32>
    %22 = vector.shape_cast %21 : vector<1x128xf32> to vector<1x1x128xf32>
    %23 = vector.broadcast %22 : vector<1x1x128xf32> to vector<16x8x128xf32>
    %24 = arith.addf %20, %23 : vector<16x8x128xf32>
    %cst_5 = arith.constant 0.000000e+00 : f32
    %25 = vector.broadcast %cst_5 : f32 to vector<16x8x128xf32>
    %26 = arith.maximumf %24, %25 : vector<16x8x128xf32>
    %c0_6 = arith.constant 0 : index
    %c0_7 = arith.constant 0 : index
    %27 = vector.load %arg4[%c0_6, %c0_7] : memref<16x128xf32, #tpu.memory_space<vmem>>, vector<16x128xf32>
    %28 = vector.shape_cast %27 : vector<16x128xf32> to vector<16x1x128xf32>
    %29 = vector.broadcast %28 : vector<16x1x128xf32> to vector<16x8x128xf32>
    %30 = arith.mulf %26, %29 : vector<16x8x128xf32>
    %cst_8 = arith.constant dense<0xFF800000> : vector<8x128xf32>
    %31 = vector.multi_reduction <maximumf>, %30, %cst_8 [0] : vector<16x8x128xf32> to vector<8x128xf32>
    %32 = arith.truncf %31 : vector<8x128xf32> to vector<8x128xbf16>
    %c0_9 = arith.constant 0 : index
    %c0_10 = arith.constant 0 : index
    %33 = vector.load %arg5[%c0_9, %c0_10] : memref<128x4xbf16, #tpu.memory_space<vmem>>, vector<128x4xbf16>
    %cst_11 = arith.constant dense<0.000000e+00> : vector<8x4xf32>
    %34 = tpu.matmul %32, %33, %cst_11 {dimension_numbers = #tpu.dot_dimension_numbers<[1], [0], [0], [1], [0, 0, 1, 1], [], []>} : vector<8x128xbf16>, vector<128x4xbf16>, vector<8x4xf32> -> vector<8x4xf32>
    %c0_12 = arith.constant 0 : index
    %c0_13 = arith.constant 0 : index
    %35 = vector.load %arg6[%c0_12, %c0_13] : memref<1x4xf32, #tpu.memory_space<vmem>>, vector<1x4xf32>
    %36 = vector.broadcast %35 : vector<1x4xf32> to vector<8x4xf32>
    %37 = arith.addf %34, %36 : vector<8x4xf32>
    %cst_14 = arith.constant dense<0xFF800000> : vector<8xf32>
    %38 = vector.multi_reduction <maximumf>, %37, %cst_14 [1] : vector<8x4xf32> to vector<8xf32>
    %39 = vector.shape_cast %38 : vector<8xf32> to vector<8x1xf32>
    %40 = vector.broadcast %39 : vector<8x1xf32> to vector<8x4xf32>
    %41 = arith.subf %37, %40 : vector<8x4xf32>
    %42 = math.exp %41 : vector<8x4xf32>
    %cst_15 = arith.constant dense<0.000000e+00> : vector<8xf32>
    %43 = vector.multi_reduction <add>, %42, %cst_15 [1] : vector<8x4xf32> to vector<8xf32>
    %44 = vector.shape_cast %43 : vector<8xf32> to vector<8x1xf32>
    %45 = math.log %44 : vector<8x1xf32>
    %46 = vector.broadcast %45 : vector<8x1xf32> to vector<8x4xf32>
    %47 = arith.subf %41, %46 : vector<8x4xf32>
    %c0_16 = arith.constant 0 : index
    %c0_17 = arith.constant 0 : index
    %48 = vector.load %arg7[%c0_16, %c0_17] : memref<8x4xf32, #tpu.memory_space<vmem>>, vector<8x4xf32>
    tpu.vector_store %arg7[%c0_16, %c0_17], %47 {strides = array<i32>} : memref<8x4xf32, #tpu.memory_space<vmem>>, vector<8x4xf32>,
    return
  }
  func.func @transform_0(%arg0: i32) -> (i32, i32) {
    %c0_i32 = arith.constant 0 : i32
    %c0_i32_0 = arith.constant 0 : i32
    return %arg0, %c0_i32 : i32, i32
  }
  func.func @transform_1(%arg0: i32) -> (i32, i32) {
    %c0_i32 = arith.constant 0 : i32
    %c0_i32_0 = arith.constant 0 : i32
    %c0_i32_1 = arith.constant 0 : i32
    return %c0_i32, %c0_i32_0 : i32, i32
  }
  func.func @transform_2(%arg0: i32) -> (i32, i32) {
    %c0_i32 = arith.constant 0 : i32
    %c0_i32_0 = arith.constant 0 : i32
    %c0_i32_1 = arith.constant 0 : i32
    return %c0_i32, %c0_i32_0 : i32, i32
  }
  func.func @transform_3(%arg0: i32) -> (i32, i32) {
    %c0_i32 = arith.constant 0 : i32
    %c0_i32_0 = arith.constant 0 : i32
    %c0_i32_1 = arith.constant 0 : i32
    return %c0_i32, %c0_i32_0 : i32, i32
  }
  func.func @transform_4(%arg0: i32) -> (i32, i32) {
    %c0_i32 = arith.constant 0 : i32
    %c0_i32_0 = arith.constant 0 : i32
    %c0_i32_1 = arith.constant 0 : i32
    return %c0_i32, %c0_i32_0 : i32, i32
  }
  func.func @transform_5(%arg0: i32) -> (i32, i32) {
    %c0_i32 = arith.constant 0 : i32
    %c0_i32_0 = arith.constant 0 : i32
    %c0_i32_1 = arith.constant 0 : i32
    return %c0_i32, %c0_i32_0 : i32, i32
  }
  func.func @transform_6(%arg0: i32) -> (i32, i32) {
    %c0_i32 = arith.constant 0 : i32
    %c0_i32_0 = arith.constant 0 : i32
    return %arg0, %c0_i32 : i32, i32
  }
}

</mosaic_0001>

<llo_original>
// kernel: cnn_forward.1
$region0: #{cnn_forward.1}
  #allocation0 [shape = 'u32[]', space=smem, size = 0x4, offset = 0x4, fixed_abs, tag = 'smem constant byte address 0x4 - core index']
  #allocation1 [shape = 'u32[144,128]{1,0:T(1,128)}', space=vmem, size = 0x12000, scoped, tag = 'internal scratch']
  %s0 = inlined_call_operand.vmem [shape: bf16[8,640], index: 0, kind: input, shape index: {}]
  %s1 = inlined_call_operand.vmem [shape: bf16[160,128], index: 1, kind: input, shape index: {}]
  %s2 = inlined_call_operand.vmem [shape: f32[1,128], index: 2, kind: input, shape index: {}]
  %s3 = inlined_call_operand.vmem [shape: f32[16,128], index: 3, kind: input, shape index: {}]
  %s4 = inlined_call_operand.vmem [shape: bf16[128,4], index: 4, kind: input, shape index: {}]
  %s5 = inlined_call_operand.vmem [shape: f32[1,4], index: 5, kind: input, shape index: {}]
  %s6 = inlined_call_operand.vmem [shape: f32[8,4], index: 6, kind: output, shape index: {}]
  %s7 = sld [smem:[#allocation0]]
  $region34: #{cnn_forward.1} parent=0
    _
  %s9 = ssub.s32 1, %s7
  %s10 = scalar_select 0, %s9, %s7
  // Predicated region
  $region2: #{cnn_forward.1} parent=0 // pred_check
    _
  $region3: #{cnn_forward.1} parent=0 // pred_check_branch
    %12 = sbr.rel (0) target = $region5
  $region4: #{cnn_forward.1} parent=0 // pred_region
    _
  $region5: #{cnn_forward.1} parent=0 // pred_fallthru
    _
  // Predicated region
  $region6: #{cnn_forward.1} parent=0 // pred_check
    _
  $region7: #{cnn_forward.1} parent=0 // pred_check_branch
    %14 = sbr.rel (0) target = $region9
  $region8: #{cnn_forward.1} parent=0 // pred_region
    _
  $region9: #{cnn_forward.1} parent=0 // pred_fallthru
    _
  // Predicated region
  $region10: #{cnn_forward.1} parent=0 // pred_check
    _
  $region11: #{cnn_forward.1} parent=0 // pred_check_branch
    %16 = sbr.rel (0) target = $region13
  $region12: #{cnn_forward.1} parent=0 // pred_region
    _
  $region13: #{cnn_forward.1} parent=0 // pred_fallthru
    _
  // Predicated region
  $region14: #{cnn_forward.1} parent=0 // pred_check
    _
  $region15: #{cnn_forward.1} parent=0 // pred_check_branch
    %18 = sbr.rel (0) target = $region17
  $region16: #{cnn_forward.1} parent=0 // pred_region
    _
  $region17: #{cnn_forward.1} parent=0 // pred_fallthru
    _
  // Predicated region
  $region18: #{cnn_forward.1} parent=0 // pred_check
    _
  $region19: #{cnn_forward.1} parent=0 // pred_check_branch
    %20 = sbr.rel (0) target = $region21
  $region20: #{cnn_forward.1} parent=0 // pred_region
    _
  $region21: #{cnn_forward.1} parent=0 // pred_fallthru
    _
  // Predicated region
  $region22: #{cnn_forward.1} parent=0 // pred_check
    _
  $region23: #{cnn_forward.1} parent=0 // pred_check_branch
    %22 = sbr.rel (0) target = $region25
  $region24: #{cnn_forward.1} parent=0 // pred_region
    _
  $region25: #{cnn_forward.1} parent=0 // pred_fallthru
    _
  %v24 = vld [vmem:[%s0] sm:$0xff]
  %v25 = vld [vmem:[%s0 + $0x8] sm:$0xff]
  %v26 = vld [vmem:[%s0 + $0x10] sm:$0xf]
  %v28 = vunpack.c.l.b16 %v24
  %v29 = vunpack.c.h.b16 %v24
  %v30 = vpack.c.b16 %v28, %v28
  %v31 = vpack.c.b16 %v29, %v29
  %32 = vrot.lane.b32.xlu0 %v30, 96
  %v33 = vpop.permute.xlu0 %32
  %34 = vrot.lane.b32.xlu0 %v31, 96
  %v35 = vpop.permute.xlu0 %34
  %vm36 = vcmask 785408
  %v37 = vsel %vm36, %v33, %v35
  %38 = vrot.lane.b32.xlu0 %v30, 64
  %v39 = vpop.permute.xlu0 %38
  %40 = vrot.lane.b32.xlu0 %v31, 64
  %v41 = vpop.permute.xlu0 %40
  %vm42 = vcmask 523264
  %v43 = vsel %vm42, %v39, %v41
  %44 = vrot.lane.b32.xlu0 %v30, 32
  %v45 = vpop.permute.xlu0 %44
  %46 = vrot.lane.b32.xlu0 %v31, 32
  %v47 = vpop.permute.xlu0 %46
  %vm48 = vcmask 261120
  %v49 = vsel %vm48, %v45, %v47
  %v51 = vunpack.c.l.b16 %v25
  %v52 = vpack.c.b16 %v51, %v51
  %53 = vrot.lane.b32.xlu0 %v52, 96
  %v54 = vpop.permute.xlu0 %53
  %v55 = vsel %vm36, %v35, %v54
  %56 = vrot.lane.b32.xlu0 %v52, 64
  %v57 = vpop.permute.xlu0 %56
  %v58 = vsel %vm42, %v41, %v57
  %59 = vrot.lane.b32.xlu0 %v52, 32
  %v60 = vpop.permute.xlu0 %59
  %v61 = vsel %vm48, %v47, %v60
  %v62 = vunpack.c.h.b16 %v25
  %v63 = vpack.c.b16 %v62, %v62
  %64 = vrot.lane.b32.xlu0 %v63, 96
  %v65 = vpop.permute.xlu0 %64
  %v66 = vsel %vm36, %v54, %v65
  %67 = vrot.lane.b32.xlu0 %v63, 64
  %v68 = vpop.permute.xlu0 %67
  %v69 = vsel %vm42, %v57, %v68
  %70 = vrot.lane.b32.xlu0 %v63, 32
  %v71 = vpop.permute.xlu0 %70
  %v72 = vsel %vm48, %v60, %v71
  %v74 = vunpack.c.l.b16 %v26
  %v75 = vpack.c.b16 %v74, %v74
  %76 = vrot.lane.b32.xlu0 %v75, 96
  %v77 = vpop.permute.xlu0 %76
  %v78 = vsel %vm36, %v65, %v77
  %79 = vrot.lane.b32.xlu0 %v75, 64
  %v80 = vpop.permute.xlu0 %79
  %v81 = vsel %vm42, %v68, %v80
  %82 = vrot.lane.b32.xlu0 %v75, 32
  %v83 = vpop.permute.xlu0 %82
  %v84 = vsel %vm48, %v71, %v83
  %vm85 = vcmask 1043456
  %v88 = vsel %vm85, %v30, %v37
  %v92 = vsel %vm85, %v31, %v35
  %v95 = vsel %vm85, %v43, %v49
  %v99 = vsel %vm85, %v41, %v47
  %v101 = vsel %vm85, %v31, %v55
  %v105 = vsel %vm85, %v52, %v54
  %v108 = vsel %vm85, %v58, %v61
  %v112 = vsel %vm85, %v57, %v60
  %v114 = vsel %vm85, %v52, %v66
  %v118 = vsel %vm85, %v63, %v65
  %v121 = vsel %vm85, %v69, %v72
  %v125 = vsel %vm85, %v68, %v71
  %v127 = vsel %vm85, %v63, %v78
  %v131 = vsel %vm85, %v75, %v77
  %v134 = vsel %vm85, %v81, %v84
  %v138 = vsel %vm85, %v80, %v83
  %v139 = vld [vmem:[%s1] sm:$0xf]
  %v140 = vld [vmem:[%s1 + $0x4] sm:$0xf]
  %v141 = vld [vmem:[%s1 + $0x8] sm:$0xf]
  %v142 = vld [vmem:[%s1 + $0xc] sm:$0xf]
  %v143 = vld [vmem:[%s1 + $0x10] sm:$0xf]
  %v144 = vld [vmem:[%s1 + $0x14] sm:$0xf]
  %v145 = vld [vmem:[%s1 + $0x18] sm:$0xf]
  %v146 = vld [vmem:[%s1 + $0x1c] sm:$0xf]
  %v147 = vld [vmem:[%s1 + $0x20] sm:$0xf]
  %v148 = vld [vmem:[%s1 + $0x24] sm:$0xf]
  %v149 = vld [vmem:[%s1 + $0x28] sm:$0xf]
  %v150 = vld [vmem:[%s1 + $0x2c] sm:$0xf]
  %v151 = vld [vmem:[%s1 + $0x30] sm:$0xf]
  %v152 = vld [vmem:[%s1 + $0x34] sm:$0xf]
  %v153 = vld [vmem:[%s1 + $0x38] sm:$0xf]
  %v154 = vld [vmem:[%s1 + $0x3c] sm:$0xf]
  %v155 = vld [vmem:[%s1 + $0x40] sm:$0xf]
  %v156 = vld [vmem:[%s1 + $0x44] sm:$0xf]
  %v157 = vld [vmem:[%s1 + $0x48] sm:$0xf]
  %v158 = vld [vmem:[%s1 + $0x4c] sm:$0xf]
  %v179 = vunpack.c.l.b16 %v139
  %v180 = vunpack.c.l.b16 %v140
  %v181 = vunpack.c.l.b16 %v141
  %v182 = vunpack.c.l.b16 %v142
  %v183 = vunpack.c.l.b16 %v143
  %v184 = vunpack.c.l.b16 %v144
  %v185 = vunpack.c.l.b16 %v145
  %v186 = vunpack.c.l.b16 %v146
  %v187 = vunpack.c.l.b16 %v147
  %v188 = vunpack.c.l.b16 %v148
  %v189 = vunpack.c.l.b16 %v149
  %v190 = vunpack.c.l.b16 %v150
  %v191 = vunpack.c.l.b16 %v151
  %v192 = vunpack.c.l.b16 %v152
  %v193 = vunpack.c.l.b16 %v153
  %v194 = vunpack.c.l.b16 %v154
  %v195 = vunpack.c.l.b16 %v155
  %v196 = vunpack.c.l.b16 %v156
  %v197 = vunpack.c.l.b16 %v157
  %v198 = vunpack.c.l.b16 %v158
  %v199 = vpack.c.b16 %v180, %v179
  %v200 = vpack.c.b16 %v182, %v181
  %v201 = vpack.c.b16 %v184, %v183
  %v202 = vpack.c.b16 %v186, %v185
  %v203 = vpack.c.b16 %v188, %v187
  %v204 = vpack.c.b16 %v190, %v189
  %v205 = vpack.c.b16 %v192, %v191
  %v206 = vpack.c.b16 %v194, %v193
  %v207 = vpack.c.b16 %v196, %v195
  %v208 = vpack.c.b16 %v198, %v197
  %vm219 = vcmask 261120
  %v220 = vsel %vm219, %v92, 0
  %v222 = vsel %vm219, %v99, 0
  %v224 = vsel %vm219, %v105, 0
  %v226 = vsel %vm219, %v112, 0
  %v228 = vsel %vm219, %v118, 0
  %v230 = vsel %vm219, %v125, 0
  %v232 = vsel %vm219, %v131, 0
  %v234 = vsel %vm219, %v138, 0
  %236 = vmatprep.subr.bf16.mxu0 0
  %237 = vmatpush1.bf16.msra.mxu0 %v199
  %238 = vmatprep.subr.bf16.mxu0 0
  %239 = vmatpush1.bf16.msra.mxu0 %v200
  %240 = vmatprep.subr.bf16.mxu0 0
  %241 = vmatpush1.bf16.msra.mxu0 %v201
  %242 = vmatprep.subr.bf16.mxu0 0
  %243 = vmatpush1.bf16.msra.mxu0 %v202
  %244 = vmatprep.subr.bf16.mxu0 0
  %245 = vmatpush1.bf16.msra.mxu0 %v203
  %246 = vmatprep.subr.bf16.mxu0 0
  %247 = vmatpush1.bf16.msra.mxu0 %v204
  %248 = vmatprep.subr.bf16.mxu0 0
  %249 = vmatpush1.bf16.msra.mxu0 %v205
  %250 = vmatprep.subr.bf16.mxu0 0
  %251 = vmatpush1.bf16.msra.mxu0 %v206
  %252 = vmatprep.subr.bf16.mxu0 0
  %253 = vmatpush1.bf16.msra.mxu0 %v207
  %254 = vmatprep.subr.bf16.mxu0 0
  %255 = vmatpush1.bf16.msra.mxu0 %v208
  %256 = vmatprep.subr.bf16.mxu0 0
  %257 = vmatpush1.bf16.msra.mxu0 0
  %258 = vmatprep.subr.bf16.mxu0 0
  %259 = vmatpush1.bf16.msra.mxu0 0
  %260 = vmatprep.subr.bf16.mxu0 0
  %261 = vmatpush1.bf16.msra.mxu0 0
  %262 = vmatprep.subr.bf16.mxu0 0
  %263 = vmatpush1.bf16.msra.mxu0 0
  %264 = vmatprep.subr.bf16.mxu0 0
  %265 = vmatpush1.bf16.msra.mxu0 0
  %266 = vmatprep.subr.bf16.mxu0 0
  %267 = vmatpush1.bf16.msra.mxu0 0
  %268 = vmatprep.mubr.bf16.mxu0 %v220
  %269 = vmatmul.mubr.bf16.gmra.mrb[0].mxu0 %v88
  %v270 = vpop.f32.mrb[0].mxu0
  %v271 = vadd.f32 0.0, %v270
  %v272 = vpop.f32.mrb[0].mxu0
  %v273 = vpop.f32.mrb[0].mxu0
  %v274 = vadd.f32 0.0, %v273
  %v275 = vpop.f32.mrb[0].mxu0
  %276 = vmatprep.mubr.bf16.mxu0 %v222
  %277 = vmatmul.mubr.bf16.gmra.mrb[0].mxu0 %v95
  %v278 = vpop.f32.mrb[0].mxu0
  %v279 = vadd.f32 0.0, %v278
  %v280 = vpop.f32.mrb[0].mxu0
  %v281 = vpop.f32.mrb[0].mxu0
  %v282 = vadd.f32 0.0, %v281
  %v283 = vpop.f32.mrb[0].mxu0
  %284 = vmatprep.mubr.bf16.mxu0 %v224
  %285 = vmatmul.mubr.bf16.gmra.mrb[0].mxu0 %v101
  %v286 = vpop.f32.mrb[0].mxu0
  %v287 = vadd.f32 0.0, %v286
  %v288 = vpop.f32.mrb[0].mxu0
  %v289 = vpop.f32.mrb[0].mxu0
  %v290 = vadd.f32 0.0, %v289
  %v291 = vpop.f32.mrb[0].mxu0
  %292 = vmatprep.mubr.bf16.mxu0 %v226
  %293 = vmatmul.mubr.bf16.gmra.mrb[0].mxu0 %v108
  %v294 = vpop.f32.mrb[0].mxu0
  %v295 = vadd.f32 0.0, %v294
  %v296 = vpop.f32.mrb[0].mxu0
  %v297 = vpop.f32.mrb[0].mxu0
  %v298 = vadd.f32 0.0, %v297
  %v299 = vpop.f32.mrb[0].mxu0
  %300 = vmatprep.mubr.bf16.mxu0 %v228
  %301 = vmatmul.mubr.bf16.gmra.mrb[0].mxu0 %v114
  %v302 = vpop.f32.mrb[0].mxu0
  %v303 = vadd.f32 0.0, %v302
  %v304 = vpop.f32.mrb[0].mxu0
  %v305 = vpop.f32.mrb[0].mxu0
  %v306 = vadd.f32 0.0, %v305
  %v307 = vpop.f32.mrb[0].mxu0
  %308 = vmatprep.mubr.bf16.mxu0 %v230
  %309 = vmatmul.mubr.bf16.gmra.mrb[0].mxu0 %v121
  %v310 = vpop.f32.mrb[0].mxu0
  %v311 = vadd.f32 0.0, %v310
  %v312 = vpop.f32.mrb[0].mxu0
  %v313 = vpop.f32.mrb[0].mxu0
  %v314 = vadd.f32 0.0, %v313
  %v315 = vpop.f32.mrb[0].mxu0
  %316 = vmatprep.mubr.bf16.mxu0 %v232
  %317 = vmatmul.mubr.bf16.gmra.mrb[0].mxu0 %v127
  %v318 = vpop.f32.mrb[0].mxu0
  %v319 = vadd.f32 0.0, %v318
  %v320 = vpop.f32.mrb[0].mxu0
  %v321 = vpop.f32.mrb[0].mxu0
  %v322 = vadd.f32 0.0, %v321
  %v323 = vpop.f32.mrb[0].mxu0
  %324 = vmatprep.mubr.bf16.mxu0 %v234
  %325 = vmatmul.mubr.bf16.gmra.mrb[0].mxu0 %v134
  %v326 = vpop.f32.mrb[0].mxu0
  %v327 = vadd.f32 0.0, %v326
  %v328 = vpop.f32.mrb[0].mxu0
  %v329 = vpop.f32.mrb[0].mxu0
  %v330 = vadd.f32 0.0, %v329
  %v331 = vpop.f32.mrb[0].mxu0
  %332 = vdwg.mxu0
  %v333 = vld [vmem:[%s2] sm:$0x1]
  %v335 = vlaneseq
  %v336 = vshrl.u32 %v335, 7
  %v337 = vsub.s32 0, %v336
  %v338 = vrot.slane %v333, %v337
  %v340 = vadd.f32 %v271, %v338
  %v341 = vadd.f32 %v274, %v338
  %v342 = vadd.f32 %v279, %v338
  %v343 = vadd.f32 %v282, %v338
  %v344 = vadd.f32 %v287, %v338
  %v345 = vadd.f32 %v290, %v338
  %v346 = vadd.f32 %v295, %v338
  %v347 = vadd.f32 %v298, %v338
  %v348 = vadd.f32 %v303, %v338
  %v349 = vadd.f32 %v306, %v338
  %v350 = vadd.f32 %v311, %v338
  %v351 = vadd.f32 %v314, %v338
  %v352 = vadd.f32 %v319, %v338
  %v353 = vadd.f32 %v322, %v338
  %v354 = vadd.f32 %v327, %v338
  %v355 = vadd.f32 %v330, %v338
  %v356 = vmax.f32 %v340, 0.0
  %v357 = vmax.f32 %v341, 0.0
  %v358 = vmax.f32 %v342, 0.0
  %v359 = vmax.f32 %v343, 0.0
  %v360 = vmax.f32 %v344, 0.0
  %v361 = vmax.f32 %v345, 0.0
  %v362 = vmax.f32 %v346, 0.0
  %v363 = vmax.f32 %v347, 0.0
  %v364 = vmax.f32 %v348, 0.0
  %v365 = vmax.f32 %v349, 0.0
  %v366 = vmax.f32 %v350, 0.0
  %v367 = vmax.f32 %v351, 0.0
  %v368 = vmax.f32 %v352, 0.0
  %v369 = vmax.f32 %v353, 0.0
  %v370 = vmax.f32 %v354, 0.0
  %v371 = vmax.f32 %v355, 0.0
  %v372 = vld [vmem:[%s3] sm:$0xff]
  %v373 = vld [vmem:[%s3 + $0x8] sm:$0xff]
  %v376 = vcombine.high %v372, %v372
  %v378 = vunpack.c.l.s4 1966171168
  %v379 = vunpack.c.0.s8 %v378
  %v380 = vlaneseq
  %v381 = vshrl.u32 %v380, 7
  %v382 = vsub.s32 %v379, %v381
  %v383 = vrot.slane %v372, %v382
  %v385 = vunpack.c.l.s4 1966171168
  %v386 = vunpack.c.0.s8 %v385
  %v387 = vlaneseq
  %v388 = vshrl.u32 %v387, 7
  %v389 = vsub.s32 %v386, %v388
  %v390 = vrot.slane %v376, %v389
  %v391 = vcombine.high %v383, %v383
  %v392 = vcombine.high %v390, %v390
  %v394 = vunpack.c.l.s4 1966171168
  %v395 = vunpack.c.0.s8 %v394
  %v396 = vlaneseq
  %v397 = vshrl.u32 %v396, 7
  %v398 = vsub.s32 %v395, %v397
  %v399 = vrot.slane %v383, %v398
  %v401 = vunpack.c.l.s4 1966171168
  %v402 = vunpack.c.0.s8 %v401
  %v403 = vlaneseq
  %v404 = vshrl.u32 %v403, 7
  %v405 = vsub.s32 %v402, %v404
  %v406 = vrot.slane %v390, %v405
  %v408 = vunpack.c.l.s4 1966171168
  %v409 = vunpack.c.0.s8 %v408
  %v410 = vlaneseq
  %v411 = vshrl.u32 %v410, 7
  %v412 = vsub.s32 %v409, %v411
  %v413 = vrot.slane %v391, %v412
  %v415 = vunpack.c.l.s4 1966171168
  %v416 = vunpack.c.0.s8 %v415
  %v417 = vlaneseq
  %v418 = vshrl.u32 %v417, 7
  %v419 = vsub.s32 %v416, %v418
  %v420 = vrot.slane %v392, %v419
  %v421 = vcombine.high %v399, %v399
  %v422 = vcombine.high %v406, %v406
  %v423 = vcombine.high %v413, %v413
  %v424 = vcombine.high %v420, %v420
  %v425 = vcombine.high %v373, %v373
  %v427 = vunpack.c.l.s4 1966171168
  %v428 = vunpack.c.0.s8 %v427
  %v429 = vlaneseq
  %v430 = vshrl.u32 %v429, 7
  %v431 = vsub.s32 %v428, %v430
  %v432 = vrot.slane %v373, %v431
  %v434 = vunpack.c.l.s4 1966171168
  %v435 = vunpack.c.0.s8 %v434
  %v436 = vlaneseq
  %v437 = vshrl.u32 %v436, 7
  %v438 = vsub.s32 %v435, %v437
  %v439 = vrot.slane %v425, %v438
  %v440 = vcombine.high %v432, %v432
  %v441 = vcombine.high %v439, %v439
  %v443 = vunpack.c.l.s4 1966171168
  %v444 = vunpack.c.0.s8 %v443
  %v445 = vlaneseq
  %v446 = vshrl.u32 %v445, 7
  %v447 = vsub.s32 %v444, %v446
  %v448 = vrot.slane %v432, %v447
  %v450 = vunpack.c.l.s4 1966171168
  %v451 = vunpack.c.0.s8 %v450
  %v452 = vlaneseq
  %v453 = vshrl.u32 %v452, 7
  %v454 = vsub.s32 %v451, %v453
  %v455 = vrot.slane %v439, %v454
  %v457 = vunpack.c.l.s4 1966171168
  %v458 = vunpack.c.0.s8 %v457
  %v459 = vlaneseq
  %v460 = vshrl.u32 %v459, 7
  %v461 = vsub.s32 %v458, %v460
  %v462 = vrot.slane %v440, %v461
  %v464 = vunpack.c.l.s4 1966171168
  %v465 = vunpack.c.0.s8 %v464
  %v466 = vlaneseq
  %v467 = vshrl.u32 %v466, 7
  %v468 = vsub.s32 %v465, %v467
  %v469 = vrot.slane %v441, %v468
  %v470 = vcombine.high %v448, %v448
  %v471 = vcombine.high %v455, %v455
  %v472 = vcombine.high %v462, %v462
  %v473 = vcombine.high %v469, %v469
  %v474 = vlaneseq
  %v475 = vshrl.u32 %v474, 7
  %v476 = vsub.s32 0, %v475
  %v477 = vrot.slane %v399, %v476
  %v478 = vlaneseq
  %v479 = vshrl.u32 %v478, 7
  %v480 = vsub.s32 0, %v479
  %v481 = vrot.slane %v413, %v480
  %v482 = vlaneseq
  %v483 = vshrl.u32 %v482, 7
  %v484 = vsub.s32 0, %v483
  %v485 = vrot.slane %v421, %v484
  %v486 = vlaneseq
  %v487 = vshrl.u32 %v486, 7
  %v488 = vsub.s32 0, %v487
  %v489 = vrot.slane %v423, %v488
  %v490 = vlaneseq
  %v491 = vshrl.u32 %v490, 7
  %v492 = vsub.s32 0, %v491
  %v493 = vrot.slane %v406, %v492
  %v494 = vlaneseq
  %v495 = vshrl.u32 %v494, 7
  %v496 = vsub.s32 0, %v495
  %v497 = vrot.slane %v420, %v496
  %v498 = vlaneseq
  %v499 = vshrl.u32 %v498, 7
  %v500 = vsub.s32 0, %v499
  %v501 = vrot.slane %v422, %v500
  %v502 = vlaneseq
  %v503 = vshrl.u32 %v502, 7
  %v504 = vsub.s32 0, %v503
  %v505 = vrot.slane %v424, %v504
  %v506 = vlaneseq
  %v507 = vshrl.u32 %v506, 7
  %v508 = vsub.s32 0, %v507
  %v509 = vrot.slane %v448, %v508
  %v510 = vlaneseq
  %v511 = vshrl.u32 %v510, 7
  %v512 = vsub.s32 0, %v511
  %v513 = vrot.slane %v462, %v512
  %v514 = vlaneseq
  %v515 = vshrl.u32 %v514, 7
  %v516 = vsub.s32 0, %v515
  %v517 = vrot.slane %v470, %v516
  %v518 = vlaneseq
  %v519 = vshrl.u32 %v518, 7
  %v520 = vsub.s32 0, %v519
  %v521 = vrot.slane %v472, %v520
  %v522 = vlaneseq
  %v523 = vshrl.u32 %v522, 7
  %v524 = vsub.s32 0, %v523
  %v525 = vrot.slane %v455, %v524
  %v526 = vlaneseq
  %v527 = vshrl.u32 %v526, 7
  %v528 = vsub.s32 0, %v527
  %v529 = vrot.slane %v469, %v528
  %v530 = vlaneseq
  %v531 = vshrl.u32 %v530, 7
  %v532 = vsub.s32 0, %v531
  %v533 = vrot.slane %v471, %v532
  %v534 = vlaneseq
  %v535 = vshrl.u32 %v534, 7
  %v536 = vsub.s32 0, %v535
  %v537 = vrot.slane %v473, %v536
  %v554 = vmul.f32 %v356, %v477
  %v555 = vmul.f32 %v357, %v481
  %v556 = vmul.f32 %v358, %v485
  %v557 = vmul.f32 %v359, %v489
  %v558 = vmul.f32 %v360, %v493
  %v559 = vmul.f32 %v361, %v497
  %v560 = vmul.f32 %v362, %v501
  %v561 = vmul.f32 %v363, %v505
  %v562 = vmul.f32 %v364, %v509
  %v563 = vmul.f32 %v365, %v513
  %v564 = vmul.f32 %v366, %v517
  %v565 = vmul.f32 %v367, %v521
  %v566 = vmul.f32 %v368, %v525
  %v567 = vmul.f32 %v369, %v529
  %v568 = vmul.f32 %v370, %v533
  %v569 = vmul.f32 %v371, %v537
  %v570 = vmax.f32 %v554, %v558
  %v571 = vmax.f32 %v555, %v559
  %v572 = vmax.f32 %v556, %v560
  %v573 = vmax.f32 %v557, %v561
  %v574 = vmax.f32 %v570, %v562
  %v575 = vmax.f32 %v571, %v563
  %v576 = vmax.f32 %v572, %v564
  %v577 = vmax.f32 %v573, %v565
  %v578 = vmax.f32 %v574, %v566
  %v579 = vmax.f32 %v575, %v567
  %v580 = vmax.f32 %v576, %v568
  %v581 = vmax.f32 %v577, %v569
  %v582 = vmax.f32 %v578, %v579
  %v583 = vmax.f32 %v580, %v581
  %v584 = vmax.f32 %v582, %v583
  %v585 = vpack.c.bf16 %v584, %v584
  %v586 = vld [vmem:[%s4] sm:$0xf]
  %v587 = vld [vmem:[%s4 + $0x4] sm:$0xf]
  %v588 = vld [vmem:[%s4 + $0x8] sm:$0xf]
  %v589 = vld [vmem:[%s4 + $0xc] sm:$0xf]
  %v590 = vld [vmem:[%s4 + $0x10] sm:$0xf]
  %v591 = vld [vmem:[%s4 + $0x14] sm:$0xf]
  %v592 = vld [vmem:[%s4 + $0x18] sm:$0xf]
  %v593 = vld [vmem:[%s4 + $0x1c] sm:$0xf]
  %v594 = vld [vmem:[%s4 + $0x20] sm:$0xf]
  %v595 = vld [vmem:[%s4 + $0x24] sm:$0xf]
  %v596 = vld [vmem:[%s4 + $0x28] sm:$0xf]
  %v597 = vld [vmem:[%s4 + $0x2c] sm:$0xf]
  %v598 = vld [vmem:[%s4 + $0x30] sm:$0xf]
  %v599 = vld [vmem:[%s4 + $0x34] sm:$0xf]
  %v600 = vld [vmem:[%s4 + $0x38] sm:$0xf]
  %v601 = vld [vmem:[%s4 + $0x3c] sm:$0xf]
  %v602 = vld [vmem:[%s5] sm:$0x1]
  %v604 = vlaneseq
  %v605 = vshrl.u32 %v604, 7
  %v606 = vsub.s32 0, %v605
  %v607 = vrot.slane %v602, %v606
  %v625 = vunpack.c.l.b16 %v586
  %v626 = vunpack.c.l.b16 %v587
  %v627 = vunpack.c.l.b16 %v588
  %v628 = vunpack.c.l.b16 %v589
  %v629 = vunpack.c.l.b16 %v590
  %v630 = vunpack.c.l.b16 %v591
  %v631 = vunpack.c.l.b16 %v592
  %v632 = vunpack.c.l.b16 %v593
  %v633 = vunpack.c.l.b16 %v594
  %v634 = vunpack.c.l.b16 %v595
  %v635 = vunpack.c.l.b16 %v596
  %v636 = vunpack.c.l.b16 %v597
  %v637 = vunpack.c.l.b16 %v598
  %v638 = vunpack.c.l.b16 %v599
  %v639 = vunpack.c.l.b16 %v600
  %v640 = vunpack.c.l.b16 %v601
  %v641 = vpack.c.b16 %v626, %v625
  %v642 = vpack.c.b16 %v628, %v627
  %v643 = vpack.c.b16 %v630, %v629
  %v644 = vpack.c.b16 %v632, %v631
  %v645 = vpack.c.b16 %v634, %v633
  %v646 = vpack.c.b16 %v636, %v635
  %v647 = vpack.c.b16 %v638, %v637
  %v648 = vpack.c.b16 %v640, %v639
  %657 = vmatprep.subr.bf16.mxu0 0
  %658 = vmatpush1.bf16.msra.mxu0 %v641
  %659 = vmatprep.subr.bf16.mxu0 0
  %660 = vmatpush1.bf16.msra.mxu0 %v642
  %661 = vmatprep.subr.bf16.mxu0 0
  %662 = vmatpush1.bf16.msra.mxu0 %v643
  %663 = vmatprep.subr.bf16.mxu0 0
  %664 = vmatpush1.bf16.msra.mxu0 %v644
  %665 = vmatprep.subr.bf16.mxu0 0
  %666 = vmatpush1.bf16.msra.mxu0 %v645
  %667 = vmatprep.subr.bf16.mxu0 0
  %668 = vmatpush1.bf16.msra.mxu0 %v646
  %669 = vmatprep.subr.bf16.mxu0 0
  %670 = vmatpush1.bf16.msra.mxu0 %v647
  %671 = vmatprep.subr.bf16.mxu0 0
  %672 = vmatpush1.bf16.msra.mxu0 %v648
  %673 = vmatprep.subr.bf16.mxu0 0
  %674 = vmatpush1.bf16.msra.mxu0 0
  %675 = vmatprep.subr.bf16.mxu0 0
  %676 = vmatpush1.bf16.msra.mxu0 0
  %677 = vmatprep.subr.bf16.mxu0 0
  %678 = vmatpush1.bf16.msra.mxu0 0
  %679 = vmatprep.subr.bf16.mxu0 0
  %680 = vmatpush1.bf16.msra.mxu0 0
  %681 = vmatprep.subr.bf16.mxu0 0
  %682 = vmatpush1.bf16.msra.mxu0 0
  %683 = vmatprep.subr.bf16.mxu0 0
  %684 = vmatpush1.bf16.msra.mxu0 0
  %685 = vmatprep.subr.bf16.mxu0 0
  %686 = vmatpush1.bf16.msra.mxu0 0
  %687 = vmatprep.subr.bf16.mxu0 0
  %688 = vmatpush1.bf16.msra.mxu0 0
  %689 = vmatprep.mubr.bf16.mxu0 0
  %690 = vmatmul.mubr.bf16.gmra.mrb[0].mxu0 %v585
  %v691 = vpop.f32.mrb[0].mxu0
  %v692 = vadd.f32 %v607, %v691
  %v693 = vpop.f32.mrb[0].mxu0
  %v694 = vpop.f32.mrb[0].mxu0
  %v695 = vpop.f32.mrb[0].mxu0
  %696 = vdwg.mxu0
  %vm697 = vcmask 31744
  %v698 = vsel %vm697, %v692, -inf
  %699 = vmax.xlane.f32.xlu0 %v698
  %v700 = vpop.xlane.xlu0 %699
  %v701 = vsub.f32 %v692, %v700
  %v702 = vmul.f32 %v701, 1.442695
  %v703 = vpow.pop %v702
  %v704 = vsel %vm697, %v703, 0.0
  %705 = vadd.xlane.f32.xlu0 %v704
  %v706 = vpop.xlane.xlu0 %705
  %v707 = vlog2.pop %v706
  %v708 = vmul.f32 %v707, 0.6931472
  %v709 = vsub.f32 %v701, %v708
  %710 = vst.msk [vmem:[%s6] sm:$0xff] %vm697, %v709
  // Predicated region
  $region26: #{cnn_forward.1} parent=0 // pred_check
    _
  $region27: #{cnn_forward.1} parent=0 // pred_check_branch
    %712 = sbr.rel (0) target = $region29
  $region28: #{cnn_forward.1} parent=0 // pred_region
    _
  $region29: #{cnn_forward.1} parent=0 // pred_fallthru
    _
  // Predicated region
  $region30: #{cnn_forward.1} parent=0 // pred_check
    _
  $region31: #{cnn_forward.1} parent=0 // pred_check_branch
    %714 = sbr.rel (0) target = $region33
  $region32: #{cnn_forward.1} parent=0 // pred_region
    _
  $region33: #{cnn_forward.1} parent=0 // pred_fallthru
    _

</llo_original>
